<compile_context>
chip_gen: v6e
topology: v6e:2x2x1
jax: 0.10.0
libtpu: 0.0.40
codegen_flags: <defaults>
</compile_context>

<pallas_src>
import jax
import jax.numpy as jnp
from jax.experimental import pallas as pl
from jax.experimental.pallas import tpu as pltpu


def critic_kernel(xT_ref, w1T_ref, w2_ref, q_ref):
    # xT_ref : [F, TB]    fused input, rows = [state_dim | action_dim | ones]
    # w1T_ref: [H+1, F]   fused layer-1 weight (b1 folded in) + one synthetic
    #                     row e_{F-1} whose post-ReLU activation is always 1
    # w2_ref : [H+1, 1]   layer-2 weight column with b2 appended as last row
    # q_ref  : [1, TB]    lane-dense Q output (batch on lanes)
    yT = jnp.maximum(
        jnp.dot(w1T_ref[...], xT_ref[...], preferred_element_type=jnp.float32),
        0.0,
    )  # [H+1, TB]
    # Layer 2 (+ b2 via the appended row) on the VPU/XLU; MXU stays single-pass.
    q_ref[...] = jnp.sum(yT * w2_ref[...], axis=0, keepdims=True).astype(q_ref.dtype)


def _fuse_weights(params):
    """Build [w1_s; w1_a; b1]^T with an extra 'always-one' hidden row, and [w2; b2]."""
    w1T = jnp.concatenate(
        [params["w1_s"], params["w1_a"], params["b1"]], axis=0).T            # [H, F]
    _, F = w1T.shape
    # Synthetic hidden unit: picks only the ones row of x_aug -> relu(1) == 1.
    ones_row = jnp.zeros((1, F), w1T.dtype).at[0, F - 1].set(1.0)
    w1T_aug = jnp.concatenate([w1T, ones_row], axis=0)                        # [H+1, F]
    w2_aug = jnp.concatenate([params["w2"], params["b2"]], axis=0)            # [H+1, 1]
    return w1T_aug, w2_aug


def _batch_tile(B, tb):
    """Lane tile width.  Single full-width block for small batches; otherwise a
    multiple of 128 chosen so there are at least 2 grid steps (v7x megacore)."""
    if B < 256:
        return B  # block == full array dims, so no 128-alignment is required
    half = ((B + 1) // 2 + 127) // 128 * 128  # round_up(cdiv(B, 2), 128)
    return min(tb, half)


def critic_forward(states, actions, params, *, tb=2048):
    """Q(s, a) for a batch. Returns [B, 1] float32 (same math as the torch module).

    tb: max batch tile width (multiple of 128).  Default 2048 suits v6e/v7x;
        on v5e prefer tb=1024 to keep the second-layer chain spill-free.
    """
    assert tb % 128 == 0, "batch tile must be a multiple of 128 lanes"
    B = states.shape[0]
    w1T, w2 = _fuse_weights(params)
    Hp1, F = w1T.shape

    # Batch straight onto the lane axis -- no intermediate [B, F] array, no pad.
    xT = jnp.concatenate(
        [states.T, actions.T, jnp.ones((1, B), states.dtype)], axis=0)        # [F, B]

    TB = _batch_tile(B, tb)
    grid = (pl.cdiv(B, TB),)

    qT = pl.pallas_call(
        critic_kernel,
        out_shape=jax.ShapeDtypeStruct((1, B), jnp.float32),
        grid=grid,
        in_specs=[
            pl.BlockSpec((F, TB), lambda i: (0, i)),       # activations (lane-tiled)
            pl.BlockSpec((Hp1, F), lambda i: (0, 0)),      # fused W1 (+ bias row)
            pl.BlockSpec((Hp1, 1), lambda i: (0, 0)),      # fused [w2; b2] column
        ],
        out_specs=pl.BlockSpec((1, TB), lambda i: (0, i)),
        compiler_params=pltpu.CompilerParams(
            dimension_semantics=("parallel",)),
    )(xT, w1T, w2)

    # Invariant: any lanes beyond B in the last (overrunning) block are invalid
    # and MUST be dropped here; they never mix with valid lanes inside the kernel.
    return qT[0, :B].reshape(B, 1)


def critic_forward_many(state_action_pairs, params, *, tb=2048):
    """Evaluate several Q(s, a) batches (e.g. critic loss, target-Q, actor-loss)
    with ONE pallas_call to amortise per-call launch + first-tile DMA cost."""
    sizes = [s.shape[0] for s, _ in state_action_pairs]
    states = jnp.concatenate([s for s, _ in state_action_pairs], axis=0)
    actions = jnp.concatenate([a for _, a in state_action_pairs], axis=0)
    q = critic_forward(states, actions, params, tb=tb)
    out, off = [], 0
    for n in sizes:
        out.append(q[off:off + n])
        off += n
    return out


def init_params(key, state_dim, action_dim, num_hiddens=30):
    k1, k2, k3 = jax.random.split(key, 3)
    # torch.randn(...) * 0.001 for first-layer weights, zeros for b1,
    # normal(0, 0.001) for the final linear weight, zero bias.
    w1_s = jax.random.normal(k1, (state_dim, num_hiddens), jnp.float32) * 0.001
    w1_a = jax.random.normal(k2, (action_dim, num_hiddens), jnp.float32) * 0.001
    b1 = jnp.zeros((1, num_hiddens), jnp.float32)
    # nn.Linear stores weight as [out, in]; keep it [in, out] for plain mm.
    w2 = jax.random.normal(k3, (num_hiddens, 1), jnp.float32) * 0.001
    b2 = jnp.zeros((1, 1), jnp.float32)
    return {"w1_s": w1_s, "w1_a": w1_a, "b1": b1, "w2": w2, "b2": b2}


def reference_forward(states, actions, p):
    y = jnp.maximum(states @ p["w1_s"] + actions @ p["w1_a"] + p["b1"], 0.0)
    return y @ p["w2"] + p["b2"]


if __name__ == "__main__":
    # Pendulum-v1: state_dim=3, action_dim=1.
    state_dim, action_dim = 3, 1

    key = jax.random.PRNGKey(0)
    kp, ks, ka = jax.random.split(key, 3)
    params = init_params(kp, state_dim, action_dim)

    # Small batch (single full-width block, grid=(1,)).
    states = jax.random.normal(ks, (8, state_dim), jnp.float32)
    actions = jax.random.normal(ka, (8, action_dim), jnp.float32)
    q = jax.block_until_ready(critic_forward(states, actions, params))
    q_ref = reference_forward(states, actions, params)
    assert q.shape == (8, 1)
    assert jnp.allclose(q, q_ref, atol=1e-6, rtol=1e-4), (q, q_ref)

    # Replay-minibatch-sized batch: TB=256, grid=(2,), last block overruns B=300.
    ks2, ka2 = jax.random.split(jax.random.PRNGKey(1))
    states2 = jax.random.normal(ks2, (300, state_dim), jnp.float32)
    actions2 = jax.random.normal(ka2, (300, action_dim), jnp.float32)
    q2 = jax.block_until_ready(critic_forward(states2, actions2, params))
    q2_ref = reference_forward(states2, actions2, params)
    assert q2.shape == (300, 1)
    assert jnp.allclose(q2, q2_ref, atol=1e-6, rtol=1e-4), (q2, q2_ref)

    # Fused multi-evaluation: two Q batches share one pallas_call launch.
    q_a, q_b = critic_forward_many([(states, actions), (states2, actions2)], params)
    jax.block_until_ready((q_a, q_b))
    assert q_a.shape == (8, 1) and q_b.shape == (300, 1)
    assert jnp.allclose(q_a, q_ref, atol=1e-6, rtol=1e-4)
    assert jnp.allclose(q_b, q2_ref, atol=1e-6, rtol=1e-4)

    print("KERNEL_OK")
</pallas_src>

<mosaic_0001>
module attributes {stable_mosaic.version = 11 : i64} {
  func.func @critic_kernel(%arg0: i32, %arg1: memref<5x8xf32, #tpu.memory_space<vmem>>, %arg2: memref<31x5xf32, #tpu.memory_space<vmem>>, %arg3: memref<31x1xf32, #tpu.memory_space<vmem>>, %arg4: memref<1x8xf32, #tpu.memory_space<vmem>>) attributes {dimension_semantics = [#tpu.dimension_semantics<parallel>], iteration_bounds = array<i64: 1>, scalar_prefetch = 0 : i64, scratch_operands = 0 : i64, tpu.core_type = #tpu.core_type<tc>, window_params = [{transform_indices = @transform_0, window_bounds = array<i64: 5, 8>}, {pipeline_mode = #tpu.pipeline_mode<synchronous>, transform_indices = @transform_1, window_bounds = array<i64: 31, 5>}, {pipeline_mode = #tpu.pipeline_mode<synchronous>, transform_indices = @transform_2, window_bounds = array<i64: 31, 1>}, {transform_indices = @transform_3, window_bounds = array<i64: 1, 8>}]} {
    %c0 = arith.constant 0 : index
    %c0_0 = arith.constant 0 : index
    %0 = vector.load %arg2[%c0, %c0_0] : memref<31x5xf32, #tpu.memory_space<vmem>>, vector<31x5xf32>
    %c0_1 = arith.constant 0 : index
    %c0_2 = arith.constant 0 : index
    %1 = vector.load %arg1[%c0_1, %c0_2] : memref<5x8xf32, #tpu.memory_space<vmem>>, vector<5x8xf32>
    %cst = arith.constant dense<0.000000e+00> : vector<31x8xf32>
    %2 = tpu.matmul %0, %1, %cst {dimension_numbers = #tpu.dot_dimension_numbers<[1], [0], [0], [1], [0, 0, 1, 1], [], []>} : vector<31x5xf32>, vector<5x8xf32>, vector<31x8xf32> -> vector<31x8xf32>
    %cst_3 = arith.constant 0.000000e+00 : f32
    %3 = vector.broadcast %cst_3 : f32 to vector<31x8xf32>
    %4 = arith.maximumf %2, %3 : vector<31x8xf32>
    %c0_4 = arith.constant 0 : index
    %c0_5 = arith.constant 0 : index
    %5 = vector.load %arg3[%c0_4, %c0_5] : memref<31x1xf32, #tpu.memory_space<vmem>>, vector<31x1xf32>
    %6 = vector.broadcast %5 : vector<31x1xf32> to vector<31x8xf32>
    %7 = arith.mulf %4, %6 : vector<31x8xf32>
    %cst_6 = arith.constant dense<0.000000e+00> : vector<8xf32>
    %8 = vector.multi_reduction <add>, %7, %cst_6 [0] : vector<31x8xf32> to vector<8xf32>
    %9 = vector.shape_cast %8 : vector<8xf32> to vector<1x8xf32>
    %c0_7 = arith.constant 0 : index
    %c0_8 = arith.constant 0 : index
    %10 = vector.load %arg4[%c0_7, %c0_8] : memref<1x8xf32, #tpu.memory_space<vmem>>, vector<1x8xf32>
    tpu.vector_store %arg4[%c0_7, %c0_8], %9 {strides = array<i32>} : memref<1x8xf32, #tpu.memory_space<vmem>>, vector<1x8xf32>,
    return
  }
  func.func @transform_0(%arg0: i32) -> (i32, i32) {
    %c0_i32 = arith.constant 0 : i32
    %c0_i32_0 = arith.constant 0 : i32
    return %c0_i32, %arg0 : i32, i32
  }
  func.func @transform_1(%arg0: i32) -> (i32, i32) {
    %c0_i32 = arith.constant 0 : i32
    %c0_i32_0 = arith.constant 0 : i32
    %c0_i32_1 = arith.constant 0 : i32
    return %c0_i32, %c0_i32_0 : i32, i32
  }
  func.func @transform_2(%arg0: i32) -> (i32, i32) {
    %c0_i32 = arith.constant 0 : i32
    %c0_i32_0 = arith.constant 0 : i32
    %c0_i32_1 = arith.constant 0 : i32
    return %c0_i32, %c0_i32_0 : i32, i32
  }
  func.func @transform_3(%arg0: i32) -> (i32, i32) {
    %c0_i32 = arith.constant 0 : i32
    %c0_i32_0 = arith.constant 0 : i32
    return %c0_i32, %arg0 : i32, i32
  }
}

</mosaic_0001>

<llo_original>
// kernel: tpu_custom_call.1
$region0: #{tpu_custom_call.1}
  #allocation0 [shape = 'u32[]', space=smem, size = 0x4, offset = 0x4, fixed_abs, tag = 'smem constant byte address 0x4 - core index']
  #allocation1 [shape = 'u32[144,128]{1,0:T(1,128)}', space=vmem, size = 0x12000, scoped, tag = 'internal scratch']
  %s0 = inlined_call_operand.vmem [shape: f32[5,8], index: 0, kind: input, shape index: {}]
  %s1 = inlined_call_operand.vmem [shape: f32[31,5], index: 1, kind: input, shape index: {}]
  %s2 = inlined_call_operand.vmem [shape: f32[31,1], index: 2, kind: input, shape index: {}]
  %s3 = inlined_call_operand.hbm [shape: f32[1,8], index: 3, kind: output, shape index: {}]
  %s4 = sld [smem:[#allocation0]]
  $region22: #{tpu_custom_call.1} parent=0
    _
  %s6 = ssub.s32 1, %s4
  %s7 = scalar_select 0, %s6, %s4
  $region1: #{tpu_custom_call.1} parent=0
    #allocation2 [shape = 'u8[512]{0}', space=vmem, size = 0x400, scoped, tag = 'output window, operand 0, single buffered']
    #allocation3 [shape = 's32[1]{0}', space=sflag, size = 0x4, scoped, tag = 'scoped memory for tpu_custom_call.1']
    %8 = vsyncpa [#allocation3], 0
    // Predicated region
    $region2: #{tpu_custom_call.1} parent=1 // pred_check
      _
    $region3: #{tpu_custom_call.1} parent=1 // pred_check_branch
      %10 = sbr.rel (0) target = $region5
    $region4: #{tpu_custom_call.1} parent=1 // pred_region
      _
    $region5: #{tpu_custom_call.1} parent=1 // pred_fallthru
      _
    // Predicated region
    $region6: #{tpu_custom_call.1} parent=1 // pred_check
      _
    $region7: #{tpu_custom_call.1} parent=1 // pred_check_branch
      %12 = sbr.rel (0) target = $region9
    $region8: #{tpu_custom_call.1} parent=1 // pred_region
      _
    $region9: #{tpu_custom_call.1} parent=1 // pred_fallthru
      _
    // Predicated region
    $region10: #{tpu_custom_call.1} parent=1 // pred_check
      _
    $region11: #{tpu_custom_call.1} parent=1 // pred_check_branch
      %14 = sbr.rel (0) target = $region13
    $region12: #{tpu_custom_call.1} parent=1 // pred_region
      _
    $region13: #{tpu_custom_call.1} parent=1 // pred_fallthru
      _
    %v15 = vld [vmem:[%s1] sm:$0xff]
    %v16 = vld [vmem:[%s1 + $0x8] sm:$0xff]
    %v17 = vld [vmem:[%s1 + $0x10] sm:$0xff]
    %v18 = vld [vmem:[%s1 + $0x18] sm:$0x7f]
    %v19 = vld [vmem:[%s0] sm:$0x1f]
    %vm20 = vcmask 39936
    %v22 = vsel %vm20, %v15, 0
    %v25 = vsel %vm20, %v16, 0
    %v28 = vsel %vm20, %v17, 0
    %v31 = vsel %vm20, %v18, 0
    %vm33 = vcmask 1044480
    %v35 = vsel %vm33, %v19, 0
    %37 = vmatprep.subr.mxu0 0.0
    %38 = vmatpush1.msra.mxu0 0.0
    %39 = vmatprep.subr.mxu0 0.0
    %40 = vmatpush1.msra.mxu0 0.0
    %41 = vmatprep.subr.mxu0 0.0
    %42 = vmatpush1.msra.mxu0 0.0
    %43 = vmatprep.subr.mxu0 0.0
    %44 = vmatpush1.msra.mxu0 0.0
    %45 = vmatprep.subr.mxu0 0.0
    %46 = vmatpush1.msra.mxu0 0.0
    %47 = vmatprep.subr.mxu0 0.0
    %48 = vmatpush1.msra.mxu0 0.0
    %49 = vmatprep.subr.mxu0 0.0
    %50 = vmatpush1.msra.mxu0 0.0
    %51 = vmatprep.subr.mxu0 0.0
    %52 = vmatpush1.msra.mxu0 0.0
    %53 = vmatprep.subr.mxu0 0.0
    %54 = vmatpush1.msra.mxu0 0.0
    %55 = vmatprep.subr.mxu0 0.0
    %56 = vmatpush1.msra.mxu0 0.0
    %57 = vmatprep.subr.mxu0 0.0
    %58 = vmatpush1.msra.mxu0 0.0
    %59 = vmatprep.subr.mxu0 0.0
    %60 = vmatpush1.msra.mxu0 0.0
    %61 = vmatprep.subr.mxu0 0.0
    %62 = vmatpush1.msra.mxu0 0.0
    %63 = vmatprep.subr.mxu0 0.0
    %64 = vmatpush1.msra.mxu0 0.0
    %65 = vmatprep.subr.mxu0 0.0
    %66 = vmatpush1.msra.mxu0 0.0
    %67 = vmatprep.subr.mxu0 0.0
    %68 = vmatpush1.msra.mxu0 %v35
    %69 = vmatprep.subr.mxu0 0.0
    %70 = vmatpush2.msra.mxu0 0.0
    %71 = vmatprep.subr.mxu0 0.0
    %72 = vmatpush2.msra.mxu0 0.0
    %73 = vmatprep.subr.mxu0 0.0
    %74 = vmatpush2.msra.mxu0 0.0
    %75 = vmatprep.subr.mxu0 0.0
    %76 = vmatpush2.msra.mxu0 0.0
    %77 = vmatprep.subr.mxu0 0.0
    %78 = vmatpush2.msra.mxu0 0.0
    %79 = vmatprep.subr.mxu0 0.0
    %80 = vmatpush2.msra.mxu0 0.0
    %81 = vmatprep.subr.mxu0 0.0
    %82 = vmatpush2.msra.mxu0 0.0
    %83 = vmatprep.subr.mxu0 0.0
    %84 = vmatpush2.msra.mxu0 0.0
    %85 = vmatprep.subr.mxu0 0.0
    %86 = vmatpush2.msra.mxu0 0.0
    %87 = vmatprep.subr.mxu0 0.0
    %88 = vmatpush2.msra.mxu0 0.0
    %89 = vmatprep.subr.mxu0 0.0
    %90 = vmatpush2.msra.mxu0 0.0
    %91 = vmatprep.subr.mxu0 0.0
    %92 = vmatpush2.msra.mxu0 0.0
    %93 = vmatprep.subr.mxu0 0.0
    %94 = vmatpush2.msra.mxu0 0.0
    %95 = vmatprep.subr.mxu0 0.0
    %96 = vmatpush2.msra.mxu0 0.0
    %97 = vmatprep.subr.mxu0 0.0
    %98 = vmatpush2.msra.mxu0 0.0
    %99 = vmatprep.subr.mxu0 0.0
    %100 = vmatpush2.msra.mxu0 0.0
    %101 = vmatprep.mubr.f32.mxu0 0.0
    %102 = vmatmul.mubr.f32.gmra.mxu0 %v22
    %v103 = vpop.f32.mrf.mxu0
    %v104 = vadd.f32 0.0, %v103
    %v105 = vpop.f32.mrf.mxu0
    %106 = vmatprep.mubr.f32.mxu0 0.0
    %107 = vmatmul.mubr.f32.gmra.mxu0 %v25
    %v108 = vpop.f32.mrf.mxu0
    %v109 = vadd.f32 0.0, %v108
    %v110 = vpop.f32.mrf.mxu0
    %111 = vmatprep.mubr.f32.mxu0 0.0
    %112 = vmatmul.mubr.f32.gmra.mxu0 %v28
    %v113 = vpop.f32.mrf.mxu0
    %v114 = vadd.f32 0.0, %v113
    %v115 = vpop.f32.mrf.mxu0
    %116 = vmatprep.mubr.f32.mxu0 0.0
    %117 = vmatmul.mubr.f32.gmra.mxu0 %v31
    %v118 = vpop.f32.mrf.mxu0
    %v119 = vadd.f32 0.0, %v118
    %v120 = vpop.f32.mrf.mxu0
    %121 = vdwg.mxu0
    %v122 = vmax.f32 %v104, 0.0
    %v123 = vmax.f32 %v109, 0.0
    %v124 = vmax.f32 %v114, 0.0
    %v125 = vmax.f32 %v119, 0.0
    %v126 = vld [vmem:[%s2] sm:$0xff]
    %v127 = vld [vmem:[%s2 + $0x8] sm:$0xff]
    %v128 = vld [vmem:[%s2 + $0x10] sm:$0xff]
    %v129 = vld [vmem:[%s2 + $0x18] sm:$0x7f]
    %131 = vset.pattern.permute.xlu0 0
    %132 = vperm.xlu0 %131, %v126
    %v133 = vpop.permute.xlu0 %132
    %136 = vset.pattern.permute.xlu0 0
    %137 = vperm.xlu0 %136, %v127
    %v138 = vpop.permute.xlu0 %137
    %141 = vset.pattern.permute.xlu0 0
    %142 = vperm.xlu0 %141, %v128
    %v143 = vpop.permute.xlu0 %142
    %146 = vset.pattern.permute.xlu0 0
    %147 = vperm.xlu0 %146, %v129
    %v148 = vpop.permute.xlu0 %147
    %v150 = vmul.f32 %v122, %v133
    %v151 = vmul.f32 %v123, %v138
    %v152 = vmul.f32 %v124, %v143
    %v153 = vmul.f32 %v125, %v148
    %vm154 = vcmask 64512
    %v155 = vsel %vm154, %v150, 0.0
    %v156 = vsel %vm154, %v151, 0.0
    %v157 = vadd.f32 %v155, %v156
    %v158 = vsel %vm154, %v152, 0.0
    %v159 = vadd.f32 %v157, %v158
    %vm160 = vcmask 63488
    %v161 = vsel %vm160, %v153, 0.0
    %v162 = vadd.f32 %v159, %v161
    %v163 = vrot.slane %v162, 4
    %v164 = vadd.f32 %v162, %v163
    %v165 = vrot.slane %v164, 2
    %v166 = vadd.f32 %v164, %v165
    %v167 = vrot.slane %v166, 1
    %v168 = vadd.f32 %v166, %v167
    %vm169 = vcmask 57344
    %170 = vst.msk [vmem:[#allocation2] sm:$0x1] %vm169, %v168
    // Predicated region
    $region14: #{tpu_custom_call.1} parent=1 // pred_check
      _
    $region15: #{tpu_custom_call.1} parent=1 // pred_check_branch
      %172 = sbr.rel (0) target = $region17
    $region16: #{tpu_custom_call.1} parent=1 // pred_region
      %s174 = ssub.s32 16, 16
      %175 = vsyncadd [#allocation3], %s174
      %s177 = sshll.u32 [#allocation2], 4
      %s178 = int_to_ptr.vmem [resolvable:$true] %s177
      %180 = dma.vmem_to_hbm [thread:$0]  %s178, 16, %s3, [#allocation3]
    $region17: #{tpu_custom_call.1} parent=1 // pred_fallthru
      _
    // Predicated region
    $region18: #{tpu_custom_call.1} parent=1 // pred_check
      _
    $region19: #{tpu_custom_call.1} parent=1 // pred_check_branch
      %182 = sbr.rel (0) target = $region21
    $region20: #{tpu_custom_call.1} parent=1 // pred_region
      %183 = dma.done [#allocation3], 16
    $region21: #{tpu_custom_call.1} parent=1 // pred_fallthru
      _
    %184 = vsyncpa [#allocation3], 1

</llo_original>
